<compile_context>
chip_gen: v7x
topology: tpu7x:2x2x1
jax: 0.10.0
libtpu: 0.0.40
codegen_flags: <defaults>
</compile_context>

<pallas_src>
import functools

import jax
import jax.numpy as jnp
from jax import lax
from jax.experimental import pallas as pl
from jax.experimental.pallas import tpu as pltpu


def _classifier_kernel(x_ref, w_ref, b_ref, o_ref, *, norm_feat: bool, n_blk: int):
    # x_ref: (n_blk, C, t_hw)   activation tile (NCHW-native, spatial on lanes)
    # w_ref: (K, C)             concatenated 1x1-conv weights (resident)
    # b_ref: (K, 1)             concatenated biases (f32)
    # o_ref: (n_blk, K, t_hw)   output tile, already in NKHW layout
    w = w_ref[...]
    b = b_ref[...].astype(jnp.float32)
    for i in range(n_blk):                                  # static, small unroll
        x = x_ref[i]                                        # (C, t_hw)
        acc = jnp.dot(w, x, preferred_element_type=jnp.float32)   # (K, t_hw), MXU f32 acc
        if norm_feat:
            # F.normalize(x, p=2, dim=1): since inv is per spatial column,
            # W @ (x*inv) == (W @ x) * inv -> normalize post-matmul, in f32.
            xf = x.astype(jnp.float32)
            ssq = jnp.sum(xf * xf, axis=0, keepdims=True)   # (1, t_hw)
            inv = lax.rsqrt(jnp.maximum(ssq, 1e-24))        # EUP; (1e-12)^2 clamp
            acc = acc * inv
        o_ref[i] = (acc + b).astype(o_ref.dtype)


def _round_up(x, m):
    return ((x + m - 1) // m) * m


def _choose_tiling(N, C, K, HW, in_isz, out_isz, vmem_budget, x_tile_target=4 << 20):
    """Pick (n_blk, t_hw) so the per-step activation block is ~1-4 MiB, fits VMEM,
    keeps lane-dense (multiple-of-128) output tiles, and leaves >=2 grid steps when
    possible (v7x dual TensorCore occupancy)."""

    def bufs_bytes(nb, t):
        # double-buffered x + out, resident weight/bias (counted 2x to be safe)
        return (2 * nb * t * (C * in_isz + K * out_isz)
                + 2 * (K * C * in_isz + K * 128 * 4))

    if HW % 128 == 0:
        cands = [t for t in range(HW, 127, -128) if HW % t == 0]   # descending divisors
    else:
        cands = [HW]   # full last dim is always legal (masked stores; small HW only)

    t_hw = cands[-1]
    for t in cands:
        if C * t * in_isz <= x_tile_target and bufs_bytes(1, t) <= vmem_budget:
            t_hw = t
            break

    # Batch-block several images per step when the spatial tile is tiny, but keep
    # at least 2 grid steps when at all possible.
    max_steps = N * (HW // t_hw)
    min_steps = min(2, max_steps)
    n_blk = 1
    if t_hw == HW:
        for nb in range(N, 0, -1):
            if N % nb:
                continue
            steps = (N // nb) * (HW // t_hw)
            if (steps >= min_steps
                    and nb * C * HW * in_isz <= x_tile_target
                    and bufs_bytes(nb, t_hw) <= vmem_budget):
                n_blk = nb
                break

    return n_blk, t_hw, bufs_bytes(n_blk, t_hw)


def prepare_classifier_params(weights, biases, channels, compute_dtype=None):
    """Concatenate the per-step 1x1-conv heads once (hoisted out of forward)."""
    w_cat = jnp.concatenate([w.reshape(w.shape[0], channels) for w in weights], axis=0)
    b_cat = jnp.concatenate(biases, axis=0).reshape(-1, 1).astype(jnp.float32)
    if compute_dtype is not None:
        w_cat = w_cat.astype(compute_dtype)     # e.g. bf16 on v6e/v7x
    return w_cat, b_cat                         # (K, C), (K, 1)


def incremental_classifier_forward(x_nchw, w_cat, b_cat, *, norm_feat=False,
                                   compute_dtype=None, out_dtype=None):
    """x_nchw: (N, C, H, W); w_cat: (K, C); b_cat: (K, 1)."""
    N, C, H, W = x_nchw.shape
    HW = H * W
    K = w_cat.shape[0]
    out_dtype = x_nchw.dtype if out_dtype is None else out_dtype

    x3d = x_nchw.reshape(N, C, HW)              # free reshape, no transpose
    if compute_dtype is not None:
        x3d = x3d.astype(compute_dtype)
        w_cat = w_cat.astype(compute_dtype)

    in_isz = jnp.dtype(x3d.dtype).itemsize
    out_isz = jnp.dtype(out_dtype).itemsize

    # Per-generation VMEM cap (v7x is 64 MiB/TC); keep a 2x safety margin.
    try:
        vmem_cap = int(pltpu.get_tpu_info().vmem_capacity_bytes)
    except Exception:
        vmem_cap = 64 * 1024 * 1024
    vmem_budget = vmem_cap // 2

    n_blk, t_hw, used = _choose_tiling(N, C, K, HW, in_isz, out_isz, vmem_budget)
    grid = (N // n_blk, HW // t_hw)
    vmem_limit = int(min(vmem_budget,
                         max(16 << 20, _round_up(2 * used + (2 << 20), 1 << 20))))

    kernel = functools.partial(_classifier_kernel, norm_feat=norm_feat, n_blk=n_blk)

    cost = pl.CostEstimate(
        flops=2 * N * HW * K * C + (3 * N * C * HW if norm_feat else 0),
        transcendentals=(N * HW) if norm_feat else 0,
        bytes_accessed=(N * C * HW) * in_isz + K * C * in_isz + K * 4
                       + N * K * HW * out_isz,
    )

    def _call(single_buffer_resident):
        def resident_spec(shape):
            if single_buffer_resident:
                return pl.BlockSpec(shape, lambda n, h: (0, 0),
                                    pipeline_mode=pl.Buffered(1))
            return pl.BlockSpec(shape, lambda n, h: (0, 0))

        return pl.pallas_call(
            kernel,
            out_shape=jax.ShapeDtypeStruct((N, K, HW), out_dtype),
            grid_spec=pltpu.PrefetchScalarGridSpec(
                num_scalar_prefetch=0,
                grid=grid,
                in_specs=[
                    pl.BlockSpec((n_blk, C, t_hw), lambda n, h: (n, 0, h)),  # activations
                    resident_spec((K, C)),                                   # weight
                    resident_spec((K, 1)),                                   # bias
                ],
                out_specs=pl.BlockSpec((n_blk, K, t_hw), lambda n, h: (n, 0, h)),
            ),
            compiler_params=pltpu.CompilerParams(
                dimension_semantics=("parallel", "parallel"),
                vmem_limit_bytes=vmem_limit,
            ),
            cost_estimate=cost,
        )(x3d, w_cat, b_cat)

    try:
        out3d = _call(True)    # single-buffer the resident weight/bias
    except Exception:
        out3d = _call(False)   # fall back to default double buffering

    return out3d.reshape(N, K, H, W)


def _reference_forward(x_nchw, weights, biases, norm_feat):
    x = x_nchw.astype(jnp.float32)
    if norm_feat:
        nrm = jnp.sqrt(jnp.sum(x * x, axis=1, keepdims=True))
        x = x / jnp.maximum(nrm, 1e-12)
    w_cat = jnp.concatenate([w.reshape(w.shape[0], x.shape[1]) for w in weights], axis=0)
    b_cat = jnp.concatenate(biases, axis=0)
    out = jnp.einsum("nchw,kc->nkhw", x, w_cat) + b_cat[None, :, None, None]
    return out.astype(x_nchw.dtype)


if __name__ == "__main__":
    key = jax.random.PRNGKey(0)

    # Module config (small, consistent with IncrementalClassifier(classes, channels)):
    classes = [8, 4, 4]      # incremental steps -> tot_classes = 16
    channels = 32
    N, H, W = 2, 16, 16
    norm_feat = True

    k_x, *k_params = jax.random.split(key, 1 + 2 * len(classes))
    x = jax.random.normal(k_x, (N, channels, H, W), dtype=jnp.float32)

    # Deterministic per-head Conv2d(channels, c, 1) parameters.
    weights, biases = [], []
    bound = 1.0 / jnp.sqrt(channels)
    for i, c in enumerate(classes):
        kw, kb = k_params[2 * i], k_params[2 * i + 1]
        weights.append(jax.random.uniform(kw, (c, channels, 1, 1),
                                          minval=-bound, maxval=bound, dtype=jnp.float32))
        biases.append(jax.random.uniform(kb, (c,),
                                         minval=-bound, maxval=bound, dtype=jnp.float32))

    # Concatenation done once (hoisted out of the per-call forward).
    w_cat, b_cat = prepare_classifier_params(weights, biases, channels)

    out = incremental_classifier_forward(x, w_cat, b_cat, norm_feat=norm_feat)
    out = jax.block_until_ready(out)

    ref = _reference_forward(x, weights, biases, norm_feat)
    assert out.shape == (N, sum(classes), H, W)
    assert jnp.allclose(out, ref, atol=1e-4, rtol=1e-4), \
        float(jnp.max(jnp.abs(out - ref)))

    print("KERNEL_OK")
</pallas_src>

<mosaic_0001>
module attributes {stable_mosaic.version = 11 : i64} {
  func.func @_classifier_kernel(%arg0: i32, %arg1: i32, %arg2: memref<1x32x256xf32, #tpu.memory_space<vmem>>, %arg3: memref<16x32xf32, #tpu.memory_space<vmem>>, %arg4: memref<16x1xf32, #tpu.memory_space<vmem>>, %arg5: memref<1x16x256xf32, #tpu.memory_space<vmem>>) attributes {dimension_semantics = [#tpu.dimension_semantics<parallel>, #tpu.dimension_semantics<parallel>], iteration_bounds = array<i64: 2, 1>, scalar_prefetch = 0 : i64, scratch_operands = 0 : i64, tpu.core_type = #tpu.core_type<tc>, window_params = [{transform_indices = @transform_0, window_bounds = array<i64: 1, 32, 256>}, {pipeline_mode = #tpu.pipeline_mode<synchronous>, transform_indices = @transform_1, window_bounds = array<i64: 16, 32>}, {pipeline_mode = #tpu.pipeline_mode<synchronous>, transform_indices = @transform_2, window_bounds = array<i64: 16, 1>}, {transform_indices = @transform_3, window_bounds = array<i64: 1, 16, 256>}]} {
    %c0 = arith.constant 0 : index
    %c0_0 = arith.constant 0 : index
    %0 = vector.load %arg3[%c0, %c0_0] : memref<16x32xf32, #tpu.memory_space<vmem>>, vector<16x32xf32>
    %c0_1 = arith.constant 0 : index
    %c0_2 = arith.constant 0 : index
    %1 = vector.load %arg4[%c0_1, %c0_2] : memref<16x1xf32, #tpu.memory_space<vmem>>, vector<16x1xf32>
    %c0_3 = arith.constant 0 : index
    %c0_4 = arith.constant 0 : index
    %c0_5 = arith.constant 0 : index
    %2 = vector.load %arg2[%c0_3, %c0_4, %c0_5] : memref<1x32x256xf32, #tpu.memory_space<vmem>>, vector<1x32x256xf32>
    %3 = vector.shape_cast %2 : vector<1x32x256xf32> to vector<32x256xf32>
    %cst = arith.constant dense<0.000000e+00> : vector<16x256xf32>
    %4 = tpu.matmul %0, %3, %cst {dimension_numbers = #tpu.dot_dimension_numbers<[1], [0], [0], [1], [0, 0, 1, 1], [], []>} : vector<16x32xf32>, vector<32x256xf32>, vector<16x256xf32> -> vector<16x256xf32>
    %5 = arith.mulf %3, %3 : vector<32x256xf32>
    %cst_6 = arith.constant dense<0.000000e+00> : vector<256xf32>
    %6 = vector.multi_reduction <add>, %5, %cst_6 [0] : vector<32x256xf32> to vector<256xf32>
    %7 = vector.shape_cast %6 : vector<256xf32> to vector<1x256xf32>
    %cst_7 = arith.constant 1.000000e-24 : f32
    %8 = vector.broadcast %cst_7 : f32 to vector<1x256xf32>
    %9 = arith.maximumf %7, %8 : vector<1x256xf32>
    %10 = math.rsqrt %9 : vector<1x256xf32>
    %11 = vector.broadcast %10 : vector<1x256xf32> to vector<16x256xf32>
    %12 = arith.mulf %4, %11 : vector<16x256xf32>
    %13 = vector.broadcast %1 : vector<16x1xf32> to vector<16x256xf32>
    %14 = arith.addf %12, %13 : vector<16x256xf32>
    %c0_8 = arith.constant 0 : index
    %c0_9 = arith.constant 0 : index
    %c0_10 = arith.constant 0 : index
    %15 = vector.load %arg5[%c0_8, %c0_9, %c0_10] : memref<1x16x256xf32, #tpu.memory_space<vmem>>, vector<1x16x256xf32>
    %16 = vector.shape_cast %15 : vector<1x16x256xf32> to vector<16x256xf32>
    %17 = vector.shape_cast %14 : vector<16x256xf32> to vector<1x16x256xf32>
    tpu.vector_store %arg5[%c0_8, %c0_9, %c0_10], %17 {strides = array<i32>} : memref<1x16x256xf32, #tpu.memory_space<vmem>>, vector<1x16x256xf32>,
    return
  }
  func.func @transform_0(%arg0: i32, %arg1: i32) -> (i32, i32, i32) {
    %c0_i32 = arith.constant 0 : i32
    %c0_i32_0 = arith.constant 0 : i32
    return %arg0, %c0_i32, %arg1 : i32, i32, i32
  }
  func.func @transform_1(%arg0: i32, %arg1: i32) -> (i32, i32) {
    %c0_i32 = arith.constant 0 : i32
    %c0_i32_0 = arith.constant 0 : i32
    %c0_i32_1 = arith.constant 0 : i32
    return %c0_i32, %c0_i32_0 : i32, i32
  }
  func.func @transform_2(%arg0: i32, %arg1: i32) -> (i32, i32) {
    %c0_i32 = arith.constant 0 : i32
    %c0_i32_0 = arith.constant 0 : i32
    %c0_i32_1 = arith.constant 0 : i32
    return %c0_i32, %c0_i32_0 : i32, i32
  }
  func.func @transform_3(%arg0: i32, %arg1: i32) -> (i32, i32, i32) {
    %c0_i32 = arith.constant 0 : i32
    %c0_i32_0 = arith.constant 0 : i32
    return %arg0, %c0_i32, %arg1 : i32, i32, i32
  }
}

module attributes {stable_mosaic.version = 11 : i64} {
  func.func @_classifier_kernel(%arg0: i32, %arg1: i32, %arg2: memref<1x32x256xf32, #tpu.memory_space<vmem>>, %arg3: memref<16x32xf32, #tpu.memory_space<vmem>>, %arg4: memref<16x1xf32, #tpu.memory_space<vmem>>, %arg5: memref<1x16x256xf32, #tpu.memory_space<vmem>>) attributes {dimension_semantics = [#tpu.dimension_semantics<parallel>, #tpu.dimension_semantics<parallel>], iteration_bounds = array<i64: 2, 1>, scalar_prefetch = 0 : i64, scratch_operands = 0 : i64, tpu.core_type = #tpu.core_type<tc>, window_params = [{transform_indices = @transform_0, window_bounds = array<i64: 1, 32, 256>}, {pipeline_mode = #tpu.pipeline_mode<synchronous>, transform_indices = @transform_1, window_bounds = array<i64: 16, 32>}, {pipeline_mode = #tpu.pipeline_mode<synchronous>, transform_indices = @transform_2, window_bounds = array<i64: 16, 1>}, {transform_indices = @transform_3, window_bounds = array<i64: 1, 16, 256>}]} {
    %c0 = arith.constant 0 : index
    %c0_0 = arith.constant 0 : index
    %0 = vector.load %arg3[%c0, %c0_0] : memref<16x32xf32, #tpu.memory_space<vmem>>, vector<16x32xf32>
    %c0_1 = arith.constant 0 : index
    %c0_2 = arith.constant 0 : index
    %1 = vector.load %arg4[%c0_1, %c0_2] : memref<16x1xf32, #tpu.memory_space<vmem>>, vector<16x1xf32>
    %c0_3 = arith.constant 0 : index
    %c0_4 = arith.constant 0 : index
    %c0_5 = arith.constant 0 : index
    %2 = vector.load %arg2[%c0_3, %c0_4, %c0_5] : memref<1x32x256xf32, #tpu.memory_space<vmem>>, vector<1x32x256xf32>
    %3 = vector.shape_cast %2 : vector<1x32x256xf32> to vector<32x256xf32>
    %cst = arith.constant dense<0.000000e+00> : vector<16x256xf32>
    %4 = tpu.matmul %0, %3, %cst {dimension_numbers = #tpu.dot_dimension_numbers<[1], [0], [0], [1], [0, 0, 1, 1], [], []>} : vector<16x32xf32>, vector<32x256xf32>, vector<16x256xf32> -> vector<16x256xf32>
    %5 = arith.mulf %3, %3 : vector<32x256xf32>
    %cst_6 = arith.constant dense<0.000000e+00> : vector<256xf32>
    %6 = vector.multi_reduction <add>, %5, %cst_6 [0] : vector<32x256xf32> to vector<256xf32>
    %7 = vector.shape_cast %6 : vector<256xf32> to vector<1x256xf32>
    %cst_7 = arith.constant 1.000000e-24 : f32
    %8 = vector.broadcast %cst_7 : f32 to vector<1x256xf32>
    %9 = arith.maximumf %7, %8 : vector<1x256xf32>
    %10 = math.rsqrt %9 : vector<1x256xf32>
    %11 = vector.broadcast %10 : vector<1x256xf32> to vector<16x256xf32>
    %12 = arith.mulf %4, %11 : vector<16x256xf32>
    %13 = vector.broadcast %1 : vector<16x1xf32> to vector<16x256xf32>
    %14 = arith.addf %12, %13 : vector<16x256xf32>
    %c0_8 = arith.constant 0 : index
    %c0_9 = arith.constant 0 : index
    %c0_10 = arith.constant 0 : index
    %15 = vector.load %arg5[%c0_8, %c0_9, %c0_10] : memref<1x16x256xf32, #tpu.memory_space<vmem>>, vector<1x16x256xf32>
    %16 = vector.shape_cast %15 : vector<1x16x256xf32> to vector<16x256xf32>
    %17 = vector.shape_cast %14 : vector<16x256xf32> to vector<1x16x256xf32>
    tpu.vector_store %arg5[%c0_8, %c0_9, %c0_10], %17 {strides = array<i32>} : memref<1x16x256xf32, #tpu.memory_space<vmem>>, vector<1x16x256xf32>,
    return
  }
  func.func @transform_0(%arg0: i32, %arg1: i32) -> (i32, i32, i32) {
    %c0_i32 = arith.constant 0 : i32
    %c0_i32_0 = arith.constant 0 : i32
    return %arg0, %c0_i32, %arg1 : i32, i32, i32
  }
  func.func @transform_1(%arg0: i32, %arg1: i32) -> (i32, i32) {
    %c0_i32 = arith.constant 0 : i32
    %c0_i32_0 = arith.constant 0 : i32
    %c0_i32_1 = arith.constant 0 : i32
    return %c0_i32, %c0_i32_0 : i32, i32
  }
  func.func @transform_2(%arg0: i32, %arg1: i32) -> (i32, i32) {
    %c0_i32 = arith.constant 0 : i32
    %c0_i32_0 = arith.constant 0 : i32
    %c0_i32_1 = arith.constant 0 : i32
    return %c0_i32, %c0_i32_0 : i32, i32
  }
  func.func @transform_3(%arg0: i32, %arg1: i32) -> (i32, i32, i32) {
    %c0_i32 = arith.constant 0 : i32
    %c0_i32_0 = arith.constant 0 : i32
    return %arg0, %c0_i32, %arg1 : i32, i32, i32
  }
}

</mosaic_0001>

<llo_original>
// kernel: tpu_custom_call.1
$region0: #{tpu_custom_call.1}
  #allocation0 [shape = 'u32[]', space=smem, size = 0x4, offset = 0x4, fixed_abs, tag = 'smem constant byte address 0x4 - core index']
  #allocation1 [shape = 'u32[144,128]{1,0:T(1,128)}', space=vmem, size = 0x12000, scoped, tag = 'internal scratch']
  %s0 = inlined_call_operand.hbm [shape: f32[2,32,256], index: 0, kind: input, shape index: {}]
  %s1 = inlined_call_operand.vmem [shape: f32[16,32], index: 1, kind: input, shape index: {}]
  %s2 = inlined_call_operand.vmem [shape: f32[16,1], index: 2, kind: input, shape index: {}]
  %s3 = inlined_call_operand.hbm [shape: f32[2,16,256], index: 3, kind: output, shape index: {}]
  %s4 = sld [smem:[#allocation0]]
  $region49: #{tpu_custom_call.1} parent=0
    _
  %s6 = ssub.s32 1, %s4
  %s7 = scalar_select 0, %s6, %s4
  $region1: #{tpu_custom_call.1} parent=0
    #allocation2 [shape = 'u8[65536]{0}', space=vmem, size = 0x10000, scoped, tag = 'input window, operand 0']
    #allocation3 [shape = 's32[2]{0}', space=sflag, size = 0x8, scoped, tag = 'scoped memory for tpu_custom_call.1']
    #allocation4 [shape = 's32[2]{0}', space=sflag, size = 0x8, scoped, tag = 'scoped memory for tpu_custom_call.1']
    #allocation5 [shape = 'u8[32768]{0}', space=vmem, size = 0x8000, scoped, tag = 'output window, operand 0']
    %8 = vsyncpa [#allocation3], 0
    %s9 = scalar_lea.sflag [#allocation3], 1
    %10 = vsyncpa %s9, 0
    %11 = vsyncpa [#allocation4], 0
    %s12 = scalar_lea.sflag [#allocation4], 1
    %13 = vsyncpa %s12, 0
    loop: start=0, step=1, limit=4
    $region2: #{tpu_custom_call.1} parent=1 // loop_pre_header
      _
    $region3: #{tpu_custom_call.1} parent=1 // loop_header
      %s15 = sphi 0, %s19
      %p16 = scmp.ge.s32.totalorder %s15, 4
      %s22 = sphi 0, %s34
      %s23 = sphi 0, %s30
      %s24 = sphi 0, %s22
      %s25 = sphi 0, %s23
      %s26 = sphi 0, %s24
      %s27 = sphi 0, %s25
      %s39 = sphi 0, %s41
      %s42 = sphi 0, %s39
      %s43 = sphi 0, %s42
      %s59 = sphi 0, %s43
      %s63 = sphi 0, %s63
      %s65 = sphi 0, %s63
      %s66 = sphi 0, %s65
      %s80 = sphi 0, %s66
      %s84 = sphi 0, %s84
      %s86 = sphi 0, %s84
      %s87 = sphi 0, %s86
      %s101 = sphi 0, %s87
      %s109 = sphi 0, %s111
      %s112 = sphi 0, %s109
      %s113 = sphi 0, %s112
      %s129 = sphi 0, %s113
    $region4: #{tpu_custom_call.1} parent=1 // loop_header_branch
      %18 = sbr.rel (%p16) target = $region8
    $region5: #{tpu_custom_call.1} parent=1 // loop_body
      %s20 = ssub.s32 %s15, 1
      %s21 = ssub.s32 %s15, 2
      %s28 = sadd.s32 1, %s23
      %p29 = scmp.ge.s32.totalorder %s28, 1
      %s30 = scalar_select %p29, 0, %s28
      %s31 = sadd.s32 1, %s22
      %s32 = scalar_select %p29, %s31, %s22
      %p33 = scmp.ge.s32.totalorder %s32, 2
      %s34 = scalar_select %p33, 0, %s32
      %s35 = ssub.s32 %s22, %s34
      %s36 = ssub.s32 %s23, %s30
      %s37 = sor.u32 %s35, %s36
      %p38 = scmp.eq.s32.totalorder %s37, 0
      %s40 = sadd.s32 %s39, 1
      %s41 = scalar_select %p38, %s39, %s40
      %p44 = pneg %p38
      %p45 = scmp.eq.s32.totalorder %s15, 1
      %p46 = por %p44, %p45
      %p47 = scmp.ne.s32.totalorder %s39, %s42
      %p48 = scmp.eq.s32.totalorder %s15, 0
      %p49 = por %p47, %p48
      %p50 = scmp.ne.s32.totalorder %s39, %s42
      %p51 = scmp.eq.s32.totalorder %s20, 1
      %p52 = por %p50, %p51
      %p53 = scmp.ne.s32.totalorder %s42, %s43
      %p54 = scmp.eq.s32.totalorder %s20, 0
      %p55 = por %p53, %p54
      %p56 = scmp.ne.s32.totalorder %s42, %s43
      %p57 = scmp.eq.s32.totalorder %s21, 1
      %p58 = por %p56, %p57
      %p60 = scmp.ne.s32.totalorder %s43, %s59
      %p61 = scmp.eq.s32.totalorder %s21, 0
      %p62 = por %p60, %p61
      %s64 = sadd.s32 %s63, 1
      %p67 = scmp.eq.s32.totalorder %s15, 1
      %p68 = scmp.ne.s32.totalorder %s63, %s65
      %p69 = scmp.eq.s32.totalorder %s15, 0
      %p70 = por %p68, %p69
      %p71 = scmp.ne.s32.totalorder %s63, %s65
      %p72 = scmp.eq.s32.totalorder %s20, 1
      %p73 = por %p71, %p72
      %p74 = scmp.ne.s32.totalorder %s65, %s66
      %p75 = scmp.eq.s32.totalorder %s20, 0
      %p76 = por %p74, %p75
      %p77 = scmp.ne.s32.totalorder %s65, %s66
      %p78 = scmp.eq.s32.totalorder %s21, 1
      %p79 = por %p77, %p78
      %p81 = scmp.ne.s32.totalorder %s66, %s80
      %p82 = scmp.eq.s32.totalorder %s21, 0
      %p83 = por %p81, %p82
      %s85 = sadd.s32 %s84, 1
      %p88 = scmp.eq.s32.totalorder %s15, 1
      %p89 = scmp.ne.s32.totalorder %s84, %s86
      %p90 = scmp.eq.s32.totalorder %s15, 0
      %p91 = por %p89, %p90
      %p92 = scmp.ne.s32.totalorder %s84, %s86
      %p93 = scmp.eq.s32.totalorder %s20, 1
      %p94 = por %p92, %p93
      %p95 = scmp.ne.s32.totalorder %s86, %s87
      %p96 = scmp.eq.s32.totalorder %s20, 0
      %p97 = por %p95, %p96
      %p98 = scmp.ne.s32.totalorder %s86, %s87
      %p99 = scmp.eq.s32.totalorder %s21, 1
      %p100 = por %p98, %p99
      %p102 = scmp.ne.s32.totalorder %s87, %s101
      %p103 = scmp.eq.s32.totalorder %s21, 0
      %p104 = por %p102, %p103
      %s105 = ssub.s32 %s22, %s34
      %s106 = ssub.s32 %s23, %s30
      %s107 = sor.u32 %s105, %s106
      %p108 = scmp.eq.s32.totalorder %s107, 0
      %s110 = sadd.s32 %s109, 1
      %s111 = scalar_select %p108, %s109, %s110
      %p114 = pneg %p108
      %p115 = scmp.eq.s32.totalorder %s15, 1
      %p116 = por %p114, %p115
      %p117 = scmp.ne.s32.totalorder %s109, %s112
      %p118 = scmp.eq.s32.totalorder %s15, 0
      %p119 = por %p117, %p118
      %p120 = scmp.ne.s32.totalorder %s109, %s112
      %p121 = scmp.eq.s32.totalorder %s20, 1
      %p122 = por %p120, %p121
      %p123 = scmp.ne.s32.totalorder %s112, %s113
      %p124 = scmp.eq.s32.totalorder %s20, 0
      %p125 = por %p123, %p124
      %p126 = scmp.ne.s32.totalorder %s112, %s113
      %p127 = scmp.eq.s32.totalorder %s21, 1
      %p128 = por %p126, %p127
      %p130 = scmp.ne.s32.totalorder %s113, %s129
      %p131 = scmp.eq.s32.totalorder %s21, 0
      %p132 = por %p130, %p131
      %p133 = scmp.le.s32.totalorder 1, %s15
      %p134 = scmp.lt.s32.totalorder %s15, 3
      %p135 = pnand %p133, %p134
      %p136 = pneg %p135
      // Predicated region
      $region9: #{tpu_custom_call.1} parent=5 // pred_check
        _
      $region10: #{tpu_custom_call.1} parent=5 // pred_check_branch
        %138 = sbr.rel (%p135) target = $region12
      $region11: #{tpu_custom_call.1} parent=5 // pred_region
        %s139 = ssub.s32 %s15, 1
        // Predicated region
        $region13: #{tpu_custom_call.1} parent=11 // pred_check
          %p140 = pneg %p76
        $region14: #{tpu_custom_call.1} parent=11 // pred_check_branch
          %142 = sbr.rel (%p140) target = $region16
        $region15: #{tpu_custom_call.1} parent=11 // pred_region
          _
        $region16: #{tpu_custom_call.1} parent=11 // pred_fallthru
          _
        // Predicated region
        $region17: #{tpu_custom_call.1} parent=11 // pred_check
          %p143 = pneg %p97
        $region18: #{tpu_custom_call.1} parent=11 // pred_check_branch
          %145 = sbr.rel (%p143) target = $region20
        $region19: #{tpu_custom_call.1} parent=11 // pred_region
          _
        $region20: #{tpu_custom_call.1} parent=11 // pred_fallthru
          _
      $region12: #{tpu_custom_call.1} parent=5 // pred_fallthru
        _
      %p146 = scmp.lt.s32.totalorder %s15, 2
      // Predicated region
      $region21: #{tpu_custom_call.1} parent=5 // pred_check
        %p147 = pneg %p146
      $region22: #{tpu_custom_call.1} parent=5 // pred_check_branch
        %149 = sbr.rel (%p147) target = $region24
      $region23: #{tpu_custom_call.1} parent=5 // pred_region
        // Predicated region
        $region25: #{tpu_custom_call.1} parent=23 // pred_check
          %p150 = pneg %p49
        $region26: #{tpu_custom_call.1} parent=23 // pred_check_branch
          %152 = sbr.rel (%p150) target = $region28
        $region27: #{tpu_custom_call.1} parent=23 // pred_region
          %s153 = sand.u32 %s39, 1
          %s154 = scalar_lea.sflag [#allocation3], %s153
          %s155 = sand.u32 %s39, 1
          %s156 = smul.addr %s155, 64
          %s157 = scalar_lea.vmem [#allocation2], %s156
          %s158 = smul.u32 2, %s23
          %s160 = ssub.s32 1024, 1024
          %161 = vsyncadd %s154, %s160
          %s162 = smul.addr %s22, 8
          %s163 = sadd.s32 %s158, %s162
          %s164 = smul.addr %s163, 128
          %s165 = scalar_lea.hbm %s0, %s164
          %s166 = sshll.u32 %s157, 4
          %s167 = int_to_ptr.vmem [resolvable:$true] %s166
          %172 = dma.hbm_to_vmem [thread:$0]  %s165, 1024, %s167, %s154, 256, 256, 16
        $region28: #{tpu_custom_call.1} parent=23 // pred_fallthru
          _
      $region24: #{tpu_custom_call.1} parent=5 // pred_fallthru
        _
      %p173 = scmp.le.s32.totalorder 1, %s15
      %p174 = scmp.lt.s32.totalorder %s15, 3
      %p175 = pnand %p173, %p174
      %p176 = pneg %p175
      // Predicated region
      $region29: #{tpu_custom_call.1} parent=5 // pred_check
        _
      $region30: #{tpu_custom_call.1} parent=5 // pred_check_branch
        %178 = sbr.rel (%p175) target = $region32
      $region31: #{tpu_custom_call.1} parent=5 // pred_region
        %s179 = ssub.s32 %s15, 1
        %s180 = sand.u32 %s42, 1
        %s181 = scalar_lea.sflag [#allocation3], %s180
        %s182 = sand.u32 %s42, 1
        %s183 = smul.addr %s182, 64
        %s184 = scalar_lea.vmem [#allocation2], %s183
        // Predicated region
        $region33: #{tpu_custom_call.1} parent=31 // pred_check
          %p185 = pneg %p55
        $region34: #{tpu_custom_call.1} parent=31 // pred_check_branch
          %187 = sbr.rel (%p185) target = $region36
        $region35: #{tpu_custom_call.1} parent=31 // pred_region
          %188 = dma.done %s181, 1024
        $region36: #{tpu_custom_call.1} parent=31 // pred_fallthru
          _
        %s189 = sand.u32 %s42, 1
        %s190 = scalar_lea.sflag [#allocation3], %s189
        %s191 = sand.u32 %s42, 1
        %s192 = smul.addr %s191, 64
        %s193 = scalar_lea.vmem [#allocation2], %s192
        %p194 = pneg %p55
        %p195 = pneg %p52
        %p196 = pneg %p76
        %p197 = pneg %p73
        %p198 = pneg %p97
        %p199 = pneg %p94
        %p200 = pneg %p125
        %p201 = pneg %p122
        %s202 = sand.u32 %s112, 1
        %s203 = scalar_lea.sflag [#allocation4], %s202
        %s204 = sand.u32 %s112, 1
        %s205 = smul.addr %s204, 32
        %s206 = scalar_lea.vmem [#allocation5], %s205
        %s207 = smul.u32 2, %s25
        %s208 = smul.u32 2, %s25
        %v209 = vld [vmem:[%s1] sm:$0xff]
        %v210 = vld [vmem:[%s1 + $0x8] sm:$0xff]
        %v211 = vld [vmem:[%s2] sm:$0xff]
        %v212 = vld [vmem:[%s2 + $0x8] sm:$0xff]
        %v213 = vld [vmem:[%s184] sm:$0xff]
        %v214 = vld [vmem:[%s184 + $0x8] sm:$0xff]
        %v215 = vld [vmem:[%s184 + $0x10] sm:$0xff]
        %v216 = vld [vmem:[%s184 + $0x18] sm:$0xff]
        %v217 = vld [vmem:[%s184 + $0x20] sm:$0xff]
        %v218 = vld [vmem:[%s184 + $0x28] sm:$0xff]
        %v219 = vld [vmem:[%s184 + $0x30] sm:$0xff]
        %v220 = vld [vmem:[%s184 + $0x38] sm:$0xff]
        %vm221 = vcmask 261120
        %v223 = vsel %vm221, %v209, 0
        %v226 = vsel %vm221, %v210, 0
        %228 = vmatprep.subr.mxu0 %v214
        %229 = vmatpush1.msra.mxu0 %v213
        %230 = vmatprep.subr.mxu0 %v216
        %231 = vmatpush1.msra.mxu0 %v215
        %232 = vmatprep.subr.mxu0 %v218
        %233 = vmatpush1.msra.mxu0 %v217
        %234 = vmatprep.subr.mxu0 %v220
        %235 = vmatpush1.msra.mxu0 %v219
        %236 = vmatprep.subr.mxu0 0.0
        %237 = vmatpush1.msra.mxu0 0.0
        %238 = vmatprep.subr.mxu0 0.0
        %239 = vmatpush1.msra.mxu0 0.0
        %240 = vmatprep.subr.mxu0 0.0
        %241 = vmatpush1.msra.mxu0 0.0
        %242 = vmatprep.subr.mxu0 0.0
        %243 = vmatpush1.msra.mxu0 0.0
        %244 = vmatprep.subr.mxu0 0.0
        %245 = vmatpush1.msra.mxu0 0.0
        %246 = vmatprep.subr.mxu0 0.0
        %247 = vmatpush1.msra.mxu0 0.0
        %248 = vmatprep.subr.mxu0 0.0
        %249 = vmatpush1.msra.mxu0 0.0
        %250 = vmatprep.subr.mxu0 0.0
        %251 = vmatpush1.msra.mxu0 0.0
        %252 = vmatprep.subr.mxu0 0.0
        %253 = vmatpush1.msra.mxu0 0.0
        %254 = vmatprep.subr.mxu0 0.0
        %255 = vmatpush1.msra.mxu0 0.0
        %256 = vmatprep.subr.mxu0 0.0
        %257 = vmatpush1.msra.mxu0 0.0
        %258 = vmatprep.subr.mxu0 0.0
        %259 = vmatpush1.msra.mxu0 0.0
        %260 = vmatprep.subr.mxu0 0.0
        %261 = vmatpush1.msra.mxu0 0.0
        %262 = vmatprep.subr.mxu0 0.0
        %263 = vmatpush1.msra.mxu0 0.0
        %264 = vmatprep.subr.mxu0 0.0
        %265 = vmatpush1.msra.mxu0 0.0
        %266 = vmatprep.subr.mxu0 0.0
        %267 = vmatpush1.msra.mxu0 0.0
        %268 = vmatprep.subr.mxu0 0.0
        %269 = vmatpush1.msra.mxu0 0.0
        %270 = vmatprep.subr.mxu0 0.0
        %271 = vmatpush1.msra.mxu0 0.0
        %272 = vmatprep.subr.mxu0 0.0
        %273 = vmatpush1.msra.mxu0 0.0
        %274 = vmatprep.subr.mxu0 0.0
        %275 = vmatpush1.msra.mxu0 0.0
        %276 = vmatprep.subr.mxu0 0.0
        %277 = vmatpush1.msra.mxu0 0.0
        %278 = vmatprep.subr.mxu0 0.0
        %279 = vmatpush1.msra.mxu0 0.0
        %280 = vmatprep.subr.mxu0 0.0
        %281 = vmatpush1.msra.mxu0 0.0
        %282 = vmatprep.subr.mxu0 0.0
        %283 = vmatpush1.msra.mxu0 0.0
        %284 = vmatprep.subr.mxu0 0.0
        %285 = vmatpush1.msra.mxu0 0.0
        %286 = vmatprep.subr.mxu0 0.0
        %287 = vmatpush1.msra.mxu0 0.0
        %288 = vmatprep.subr.mxu0 0.0
        %289 = vmatpush1.msra.mxu0 0.0
        %290 = vmatprep.subr.mxu0 0.0
        %291 = vmatpush1.msra.mxu0 0.0
        %292 = vmatprep.mubr.f32.mxu0 0.0
        %293 = vmatmul.mubr.f32.gmra.mrb[0].mxu0 %v223
        %v294 = vpop.f32.mrb[0].mxu0
        %v295 = vadd.f32 0.0, %v294
        %v296 = vpop.f32.mrb[0].mxu0
        %v297 = vadd.f32 0.0, %v296
        %298 = vmatprep.mubr.f32.mxu0 0.0
        %299 = vmatmul.mubr.f32.gmra.mrb[0].mxu0 %v226
        %v300 = vpop.f32.mrb[0].mxu0
        %v301 = vadd.f32 0.0, %v300
        %v302 = vpop.f32.mrb[0].mxu0
        %v303 = vadd.f32 0.0, %v302
        %304 = vdwg.mxu0
        %v305 = vmul.f32 %v213, %v213
        %v306 = vmul.f32 %v214, %v214
        %v307 = vmul.f32 %v215, %v215
        %v308 = vmul.f32 %v216, %v216
        %v309 = vmul.f32 %v217, %v217
        %v310 = vmul.f32 %v218, %v218
        %v311 = vmul.f32 %v219, %v219
        %v312 = vmul.f32 %v220, %v220
        %v313 = vadd.f32 %v305, %v307
        %v314 = vadd.f32 %v313, %v309
        %v315 = vadd.f32 %v314, %v311
        %v316 = vrot.slane %v315, 4
        %v317 = vadd.f32 %v315, %v316
        %v318 = vrot.slane %v317, 2
        %v319 = vadd.f32 %v317, %v318
        %v320 = vrot.slane %v319, 1
        %v321 = vadd.f32 %v319, %v320
        %v322 = vadd.f32 %v306, %v308
        %v323 = vadd.f32 %v322, %v310
        %v324 = vadd.f32 %v323, %v312
        %v325 = vrot.slane %v324, 4
        %v326 = vadd.f32 %v324, %v325
        %v327 = vrot.slane %v326, 2
        %v328 = vadd.f32 %v326, %v327
        %v329 = vrot.slane %v328, 1
        %v330 = vadd.f32 %v328, %v329
        %v331 = vmax.f32 %v321, 1e-24
        %v332 = vmax.f32 %v330, 1e-24
        %v333 = vrsqrt.pop %v331
        %v334 = vrsqrt.pop %v332
        %v335 = vmul.f32 %v295, %v333
        %v336 = vmul.f32 %v297, %v334
        %v337 = vmul.f32 %v301, %v333
        %v338 = vmul.f32 %v303, %v334
        %340 = vset.pattern.permute.xlu0 0
        %341 = vperm.xlu0 %340, %v211
        %v342 = vpop.permute.xlu0 %341
        %345 = vset.pattern.permute.xlu0 0
        %346 = vperm.xlu0 %345, %v212
        %v347 = vpop.permute.xlu0 %346
        %v349 = vadd.f32 %v335, %v342
        %v350 = vadd.f32 %v336, %v342
        %v351 = vadd.f32 %v337, %v347
        %v352 = vadd.f32 %v338, %v347
        %353 = vst [vmem:[%s206] sm:$0xff] %v349
        %354 = vst [vmem:[%s206 + $0x8] sm:$0xff] %v350
        %355 = vst [vmem:[%s206 + $0x10] sm:$0xff] %v351
        %356 = vst [vmem:[%s206 + $0x18] sm:$0xff] %v352
        %s357 = sand.u32 %s112, 1
        %s358 = scalar_lea.sflag [#allocation4], %s357
        %s359 = sand.u32 %s112, 1
        %s360 = smul.addr %s359, 32
        %s361 = scalar_lea.vmem [#allocation5], %s360
        // Predicated region
        $region37: #{tpu_custom_call.1} parent=31 // pred_check
          %p362 = pneg %p122
        $region38: #{tpu_custom_call.1} parent=31 // pred_check_branch
          %364 = sbr.rel (%p362) target = $region40
        $region39: #{tpu_custom_call.1} parent=31 // pred_region
          %s365 = smul.u32 2, %s25
          %s367 = ssub.s32 512, 512
          %368 = vsyncadd %s358, %s367
          %s369 = smul.addr %s24, 4
          %s370 = sadd.s32 %s365, %s369
          %s371 = smul.addr %s370, 128
          %s372 = scalar_lea.hbm %s3, %s371
          %s373 = sshll.u32 %s361, 4
          %s374 = int_to_ptr.vmem [resolvable:$true] %s373
          %379 = dma.vmem_to_hbm [thread:$0]  %s374, 512, %s372, %s358, 256, 256, 16
        $region40: #{tpu_custom_call.1} parent=31 // pred_fallthru
          _
      $region32: #{tpu_custom_call.1} parent=5 // pred_fallthru
        _
      %p380 = scmp.le.s32.totalorder 2, %s15
      // Predicated region
      $region41: #{tpu_custom_call.1} parent=5 // pred_check
        %p381 = pneg %p380
      $region42: #{tpu_custom_call.1} parent=5 // pred_check_branch
        %383 = sbr.rel (%p381) target = $region44
      $region43: #{tpu_custom_call.1} parent=5 // pred_region
        %s384 = ssub.s32 %s15, 2
        // Predicated region
        $region45: #{tpu_custom_call.1} parent=43 // pred_check
          %p385 = pneg %p128
        $region46: #{tpu_custom_call.1} parent=43 // pred_check_branch
          %387 = sbr.rel (%p385) target = $region48
        $region47: #{tpu_custom_call.1} parent=43 // pred_region
          %s388 = sand.u32 %s113, 1
          %s389 = scalar_lea.sflag [#allocation4], %s388
          %s390 = sand.u32 %s113, 1
          %s391 = smul.addr %s390, 32
          %s392 = scalar_lea.vmem [#allocation5], %s391
          %393 = dma.done %s389, 512
        $region48: #{tpu_custom_call.1} parent=43 // pred_fallthru
          _
      $region44: #{tpu_custom_call.1} parent=5 // pred_fallthru
        _
    $region6: #{tpu_custom_call.1} parent=1 // loop_footer
      %s19 = sadd.s32 1, %s15
    $region7: #{tpu_custom_call.1} parent=1 // loop_footer_branch
      %14 = sbr.rel target = $region3
    $region8: #{tpu_custom_call.1} parent=1 // loop_exit
      _
    %394 = vsyncpa [#allocation3], 1
    %s395 = scalar_lea.sflag [#allocation3], 1
    %396 = vsyncpa %s395, 1
    %397 = vsyncpa [#allocation4], 1
    %s398 = scalar_lea.sflag [#allocation4], 1
    %399 = vsyncpa %s398, 1

// kernel: tpu_custom_call.1
$region0: #{tpu_custom_call.1}
  #allocation0 [shape = 'u32[]', space=smem, size = 0x4, offset = 0x4, fixed_abs, tag = 'smem constant byte address 0x4 - core index']
  #allocation1 [shape = 'u32[144,128]{1,0:T(1,128)}', space=vmem, size = 0x12000, scoped, tag = 'internal scratch']
  %s0 = inlined_call_operand.hbm [shape: f32[2,32,256], index: 0, kind: input, shape index: {}]
  %s1 = inlined_call_operand.vmem [shape: f32[16,32], index: 1, kind: input, shape index: {}]
  %s2 = inlined_call_operand.vmem [shape: f32[16,1], index: 2, kind: input, shape index: {}]
  %s3 = inlined_call_operand.hbm [shape: f32[2,16,256], index: 3, kind: output, shape index: {}]
  %s4 = sld [smem:[#allocation0]]
  $region49: #{tpu_custom_call.1} parent=0
    _
  %s6 = ssub.s32 1, %s4
  %s7 = scalar_select 0, %s6, %s4
  $region1: #{tpu_custom_call.1} parent=0
    #allocation2 [shape = 'u8[65536]{0}', space=vmem, size = 0x10000, scoped, tag = 'input window, operand 0']
    #allocation3 [shape = 's32[2]{0}', space=sflag, size = 0x8, scoped, tag = 'scoped memory for tpu_custom_call.1']
    #allocation4 [shape = 's32[2]{0}', space=sflag, size = 0x8, scoped, tag = 'scoped memory for tpu_custom_call.1']
    #allocation5 [shape = 'u8[32768]{0}', space=vmem, size = 0x8000, scoped, tag = 'output window, operand 0']
    %8 = vsyncpa [#allocation3], 0
    %s9 = scalar_lea.sflag [#allocation3], 1
    %10 = vsyncpa %s9, 0
    %11 = vsyncpa [#allocation4], 0
    %s12 = scalar_lea.sflag [#allocation4], 1
    %13 = vsyncpa %s12, 0
    loop: start=0, step=1, limit=4
    $region2: #{tpu_custom_call.1} parent=1 // loop_pre_header
      _
    $region3: #{tpu_custom_call.1} parent=1 // loop_header
      %s15 = sphi 0, %s19
      %p16 = scmp.ge.s32.totalorder %s15, 4
      %s22 = sphi 0, %s34
      %s23 = sphi 0, %s30
      %s24 = sphi 0, %s22
      %s25 = sphi 0, %s23
      %s26 = sphi 0, %s24
      %s27 = sphi 0, %s25
      %s39 = sphi 0, %s41
      %s42 = sphi 0, %s39
      %s43 = sphi 0, %s42
      %s59 = sphi 0, %s43
      %s63 = sphi 0, %s63
      %s65 = sphi 0, %s63
      %s66 = sphi 0, %s65
      %s80 = sphi 0, %s66
      %s84 = sphi 0, %s84
      %s86 = sphi 0, %s84
      %s87 = sphi 0, %s86
      %s101 = sphi 0, %s87
      %s109 = sphi 0, %s111
      %s112 = sphi 0, %s109
      %s113 = sphi 0, %s112
      %s129 = sphi 0, %s113
    $region4: #{tpu_custom_call.1} parent=1 // loop_header_branch
      %18 = sbr.rel (%p16) target = $region8
    $region5: #{tpu_custom_call.1} parent=1 // loop_body
      %s20 = ssub.s32 %s15, 1
      %s21 = ssub.s32 %s15, 2
      %s28 = sadd.s32 1, %s23
      %p29 = scmp.ge.s32.totalorder %s28, 1
      %s30 = scalar_select %p29, 0, %s28
      %s31 = sadd.s32 1, %s22
      %s32 = scalar_select %p29, %s31, %s22
      %p33 = scmp.ge.s32.totalorder %s32, 2
      %s34 = scalar_select %p33, 0, %s32
      %s35 = ssub.s32 %s22, %s34
      %s36 = ssub.s32 %s23, %s30
      %s37 = sor.u32 %s35, %s36
      %p38 = scmp.eq.s32.totalorder %s37, 0
      %s40 = sadd.s32 %s39, 1
      %s41 = scalar_select %p38, %s39, %s40
      %p44 = pneg %p38
      %p45 = scmp.eq.s32.totalorder %s15, 1
      %p46 = por %p44, %p45
      %p47 = scmp.ne.s32.totalorder %s39, %s42
      %p48 = scmp.eq.s32.totalorder %s15, 0
      %p49 = por %p47, %p48
      %p50 = scmp.ne.s32.totalorder %s39, %s42
      %p51 = scmp.eq.s32.totalorder %s20, 1
      %p52 = por %p50, %p51
      %p53 = scmp.ne.s32.totalorder %s42, %s43
      %p54 = scmp.eq.s32.totalorder %s20, 0
      %p55 = por %p53, %p54
      %p56 = scmp.ne.s32.totalorder %s42, %s43
      %p57 = scmp.eq.s32.totalorder %s21, 1
      %p58 = por %p56, %p57
      %p60 = scmp.ne.s32.totalorder %s43, %s59
      %p61 = scmp.eq.s32.totalorder %s21, 0
      %p62 = por %p60, %p61
      %s64 = sadd.s32 %s63, 1
      %p67 = scmp.eq.s32.totalorder %s15, 1
      %p68 = scmp.ne.s32.totalorder %s63, %s65
      %p69 = scmp.eq.s32.totalorder %s15, 0
      %p70 = por %p68, %p69
      %p71 = scmp.ne.s32.totalorder %s63, %s65
      %p72 = scmp.eq.s32.totalorder %s20, 1
      %p73 = por %p71, %p72
      %p74 = scmp.ne.s32.totalorder %s65, %s66
      %p75 = scmp.eq.s32.totalorder %s20, 0
      %p76 = por %p74, %p75
      %p77 = scmp.ne.s32.totalorder %s65, %s66
      %p78 = scmp.eq.s32.totalorder %s21, 1
      %p79 = por %p77, %p78
      %p81 = scmp.ne.s32.totalorder %s66, %s80
      %p82 = scmp.eq.s32.totalorder %s21, 0
      %p83 = por %p81, %p82
      %s85 = sadd.s32 %s84, 1
      %p88 = scmp.eq.s32.totalorder %s15, 1
      %p89 = scmp.ne.s32.totalorder %s84, %s86
      %p90 = scmp.eq.s32.totalorder %s15, 0
      %p91 = por %p89, %p90
      %p92 = scmp.ne.s32.totalorder %s84, %s86
      %p93 = scmp.eq.s32.totalorder %s20, 1
      %p94 = por %p92, %p93
      %p95 = scmp.ne.s32.totalorder %s86, %s87
      %p96 = scmp.eq.s32.totalorder %s20, 0
      %p97 = por %p95, %p96
      %p98 = scmp.ne.s32.totalorder %s86, %s87
      %p99 = scmp.eq.s32.totalorder %s21, 1
      %p100 = por %p98, %p99
      %p102 = scmp.ne.s32.totalorder %s87, %s101
      %p103 = scmp.eq.s32.totalorder %s21, 0
      %p104 = por %p102, %p103
      %s105 = ssub.s32 %s22, %s34
      %s106 = ssub.s32 %s23, %s30
      %s107 = sor.u32 %s105, %s106
      %p108 = scmp.eq.s32.totalorder %s107, 0
      %s110 = sadd.s32 %s109, 1
      %s111 = scalar_select %p108, %s109, %s110
      %p114 = pneg %p108
      %p115 = scmp.eq.s32.totalorder %s15, 1
      %p116 = por %p114, %p115
      %p117 = scmp.ne.s32.totalorder %s109, %s112
      %p118 = scmp.eq.s32.totalorder %s15, 0
      %p119 = por %p117, %p118
      %p120 = scmp.ne.s32.totalorder %s109, %s112
      %p121 = scmp.eq.s32.totalorder %s20, 1
      %p122 = por %p120, %p121
      %p123 = scmp.ne.s32.totalorder %s112, %s113
      %p124 = scmp.eq.s32.totalorder %s20, 0
      %p125 = por %p123, %p124
      %p126 = scmp.ne.s32.totalorder %s112, %s113
      %p127 = scmp.eq.s32.totalorder %s21, 1
      %p128 = por %p126, %p127
      %p130 = scmp.ne.s32.totalorder %s113, %s129
      %p131 = scmp.eq.s32.totalorder %s21, 0
      %p132 = por %p130, %p131
      %p133 = scmp.le.s32.totalorder 1, %s15
      %p134 = scmp.lt.s32.totalorder %s15, 3
      %p135 = pnand %p133, %p134
      %p136 = pneg %p135
      // Predicated region
      $region9: #{tpu_custom_call.1} parent=5 // pred_check
        _
      $region10: #{tpu_custom_call.1} parent=5 // pred_check_branch
        %138 = sbr.rel (%p135) target = $region12
      $region11: #{tpu_custom_call.1} parent=5 // pred_region
        %s139 = ssub.s32 %s15, 1
        // Predicated region
        $region13: #{tpu_custom_call.1} parent=11 // pred_check
          %p140 = pneg %p76
        $region14: #{tpu_custom_call.1} parent=11 // pred_check_branch
          %142 = sbr.rel (%p140) target = $region16
        $region15: #{tpu_custom_call.1} parent=11 // pred_region
          _
        $region16: #{tpu_custom_call.1} parent=11 // pred_fallthru
          _
        // Predicated region
        $region17: #{tpu_custom_call.1} parent=11 // pred_check
          %p143 = pneg %p97
        $region18: #{tpu_custom_call.1} parent=11 // pred_check_branch
          %145 = sbr.rel (%p143) target = $region20
        $region19: #{tpu_custom_call.1} parent=11 // pred_region
          _
        $region20: #{tpu_custom_call.1} parent=11 // pred_fallthru
          _
      $region12: #{tpu_custom_call.1} parent=5 // pred_fallthru
        _
      %p146 = scmp.lt.s32.totalorder %s15, 2
      // Predicated region
      $region21: #{tpu_custom_call.1} parent=5 // pred_check
        %p147 = pneg %p146
      $region22: #{tpu_custom_call.1} parent=5 // pred_check_branch
        %149 = sbr.rel (%p147) target = $region24
      $region23: #{tpu_custom_call.1} parent=5 // pred_region
        // Predicated region
        $region25: #{tpu_custom_call.1} parent=23 // pred_check
          %p150 = pneg %p49
        $region26: #{tpu_custom_call.1} parent=23 // pred_check_branch
          %152 = sbr.rel (%p150) target = $region28
        $region27: #{tpu_custom_call.1} parent=23 // pred_region
          %s153 = sand.u32 %s39, 1
          %s154 = scalar_lea.sflag [#allocation3], %s153
          %s155 = sand.u32 %s39, 1
          %s156 = smul.addr %s155, 64
          %s157 = scalar_lea.vmem [#allocation2], %s156
          %s158 = smul.u32 2, %s23
          %s160 = ssub.s32 1024, 1024
          %161 = vsyncadd %s154, %s160
          %s162 = smul.addr %s22, 8
          %s163 = sadd.s32 %s158, %s162
          %s164 = smul.addr %s163, 128
          %s165 = scalar_lea.hbm %s0, %s164
          %s166 = sshll.u32 %s157, 4
          %s167 = int_to_ptr.vmem [resolvable:$true] %s166
          %172 = dma.hbm_to_vmem [thread:$0]  %s165, 1024, %s167, %s154, 256, 256, 16
        $region28: #{tpu_custom_call.1} parent=23 // pred_fallthru
          _
      $region24: #{tpu_custom_call.1} parent=5 // pred_fallthru
        _
      %p173 = scmp.le.s32.totalorder 1, %s15
      %p174 = scmp.lt.s32.totalorder %s15, 3
      %p175 = pnand %p173, %p174
      %p176 = pneg %p175
      // Predicated region
      $region29: #{tpu_custom_call.1} parent=5 // pred_check
        _
      $region30: #{tpu_custom_call.1} parent=5 // pred_check_branch
        %178 = sbr.rel (%p175) target = $region32
      $region31: #{tpu_custom_call.1} parent=5 // pred_region
        %s179 = ssub.s32 %s15, 1
        %s180 = sand.u32 %s42, 1
        %s181 = scalar_lea.sflag [#allocation3], %s180
        %s182 = sand.u32 %s42, 1
        %s183 = smul.addr %s182, 64
        %s184 = scalar_lea.vmem [#allocation2], %s183
        // Predicated region
        $region33: #{tpu_custom_call.1} parent=31 // pred_check
          %p185 = pneg %p55
        $region34: #{tpu_custom_call.1} parent=31 // pred_check_branch
          %187 = sbr.rel (%p185) target = $region36
        $region35: #{tpu_custom_call.1} parent=31 // pred_region
          %188 = dma.done %s181, 1024
        $region36: #{tpu_custom_call.1} parent=31 // pred_fallthru
          _
        %s189 = sand.u32 %s42, 1
        %s190 = scalar_lea.sflag [#allocation3], %s189
        %s191 = sand.u32 %s42, 1
        %s192 = smul.addr %s191, 64
        %s193 = scalar_lea.vmem [#allocation2], %s192
        %p194 = pneg %p55
        %p195 = pneg %p52
        %p196 = pneg %p76
        %p197 = pneg %p73
        %p198 = pneg %p97
        %p199 = pneg %p94
        %p200 = pneg %p125
        %p201 = pneg %p122
        %s202 = sand.u32 %s112, 1
        %s203 = scalar_lea.sflag [#allocation4], %s202
        %s204 = sand.u32 %s112, 1
        %s205 = smul.addr %s204, 32
        %s206 = scalar_lea.vmem [#allocation5], %s205
        %s207 = smul.u32 2, %s25
        %s208 = smul.u32 2, %s25
        %v209 = vld [vmem:[%s1] sm:$0xff]
        %v210 = vld [vmem:[%s1 + $0x8] sm:$0xff]
        %v211 = vld [vmem:[%s2] sm:$0xff]
        %v212 = vld [vmem:[%s2 + $0x8] sm:$0xff]
        %v213 = vld [vmem:[%s184] sm:$0xff]
        %v214 = vld [vmem:[%s184 + $0x8] sm:$0xff]
        %v215 = vld [vmem:[%s184 + $0x10] sm:$0xff]
        %v216 = vld [vmem:[%s184 + $0x18] sm:$0xff]
        %v217 = vld [vmem:[%s184 + $0x20] sm:$0xff]
        %v218 = vld [vmem:[%s184 + $0x28] sm:$0xff]
        %v219 = vld [vmem:[%s184 + $0x30] sm:$0xff]
        %v220 = vld [vmem:[%s184 + $0x38] sm:$0xff]
        %vm221 = vcmask 261120
        %v223 = vsel %vm221, %v209, 0
        %v226 = vsel %vm221, %v210, 0
        %228 = vmatprep.subr.mxu0 %v214
        %229 = vmatpush1.msra.mxu0 %v213
        %230 = vmatprep.subr.mxu0 %v216
        %231 = vmatpush1.msra.mxu0 %v215
        %232 = vmatprep.subr.mxu0 %v218
        %233 = vmatpush1.msra.mxu0 %v217
        %234 = vmatprep.subr.mxu0 %v220
        %235 = vmatpush1.msra.mxu0 %v219
        %236 = vmatprep.subr.mxu0 0.0
        %237 = vmatpush1.msra.mxu0 0.0
        %238 = vmatprep.subr.mxu0 0.0
        %239 = vmatpush1.msra.mxu0 0.0
        %240 = vmatprep.subr.mxu0 0.0
        %241 = vmatpush1.msra.mxu0 0.0
        %242 = vmatprep.subr.mxu0 0.0
        %243 = vmatpush1.msra.mxu0 0.0
        %244 = vmatprep.subr.mxu0 0.0
        %245 = vmatpush1.msra.mxu0 0.0
        %246 = vmatprep.subr.mxu0 0.0
        %247 = vmatpush1.msra.mxu0 0.0
        %248 = vmatprep.subr.mxu0 0.0
        %249 = vmatpush1.msra.mxu0 0.0
        %250 = vmatprep.subr.mxu0 0.0
        %251 = vmatpush1.msra.mxu0 0.0
        %252 = vmatprep.subr.mxu0 0.0
        %253 = vmatpush1.msra.mxu0 0.0
        %254 = vmatprep.subr.mxu0 0.0
        %255 = vmatpush1.msra.mxu0 0.0
        %256 = vmatprep.subr.mxu0 0.0
        %257 = vmatpush1.msra.mxu0 0.0
        %258 = vmatprep.subr.mxu0 0.0
        %259 = vmatpush1.msra.mxu0 0.0
        %260 = vmatprep.subr.mxu0 0.0
        %261 = vmatpush1.msra.mxu0 0.0
        %262 = vmatprep.subr.mxu0 0.0
        %263 = vmatpush1.msra.mxu0 0.0
        %264 = vmatprep.subr.mxu0 0.0
        %265 = vmatpush1.msra.mxu0 0.0
        %266 = vmatprep.subr.mxu0 0.0
        %267 = vmatpush1.msra.mxu0 0.0
        %268 = vmatprep.subr.mxu0 0.0
        %269 = vmatpush1.msra.mxu0 0.0
        %270 = vmatprep.subr.mxu0 0.0
        %271 = vmatpush1.msra.mxu0 0.0
        %272 = vmatprep.subr.mxu0 0.0
        %273 = vmatpush1.msra.mxu0 0.0
        %274 = vmatprep.subr.mxu0 0.0
        %275 = vmatpush1.msra.mxu0 0.0
        %276 = vmatprep.subr.mxu0 0.0
        %277 = vmatpush1.msra.mxu0 0.0
        %278 = vmatprep.subr.mxu0 0.0
        %279 = vmatpush1.msra.mxu0 0.0
        %280 = vmatprep.subr.mxu0 0.0
        %281 = vmatpush1.msra.mxu0 0.0
        %282 = vmatprep.subr.mxu0 0.0
        %283 = vmatpush1.msra.mxu0 0.0
        %284 = vmatprep.subr.mxu0 0.0
        %285 = vmatpush1.msra.mxu0 0.0
        %286 = vmatprep.subr.mxu0 0.0
        %287 = vmatpush1.msra.mxu0 0.0
        %288 = vmatprep.subr.mxu0 0.0
        %289 = vmatpush1.msra.mxu0 0.0
        %290 = vmatprep.subr.mxu0 0.0
        %291 = vmatpush1.msra.mxu0 0.0
        %292 = vmatprep.mubr.f32.mxu0 0.0
        %293 = vmatmul.mubr.f32.gmra.mrb[0].mxu0 %v223
        %v294 = vpop.f32.mrb[0].mxu0
        %v295 = vadd.f32 0.0, %v294
        %v296 = vpop.f32.mrb[0].mxu0
        %v297 = vadd.f32 0.0, %v296
        %298 = vmatprep.mubr.f32.mxu0 0.0
        %299 = vmatmul.mubr.f32.gmra.mrb[0].mxu0 %v226
        %v300 = vpop.f32.mrb[0].mxu0
        %v301 = vadd.f32 0.0, %v300
        %v302 = vpop.f32.mrb[0].mxu0
        %v303 = vadd.f32 0.0, %v302
        %304 = vdwg.mxu0
        %v305 = vmul.f32 %v213, %v213
        %v306 = vmul.f32 %v214, %v214
        %v307 = vmul.f32 %v215, %v215
        %v308 = vmul.f32 %v216, %v216
        %v309 = vmul.f32 %v217, %v217
        %v310 = vmul.f32 %v218, %v218
        %v311 = vmul.f32 %v219, %v219
        %v312 = vmul.f32 %v220, %v220
        %v313 = vadd.f32 %v305, %v307
        %v314 = vadd.f32 %v313, %v309
        %v315 = vadd.f32 %v314, %v311
        %v316 = vrot.slane %v315, 4
        %v317 = vadd.f32 %v315, %v316
        %v318 = vrot.slane %v317, 2
        %v319 = vadd.f32 %v317, %v318
        %v320 = vrot.slane %v319, 1
        %v321 = vadd.f32 %v319, %v320
        %v322 = vadd.f32 %v306, %v308
        %v323 = vadd.f32 %v322, %v310
        %v324 = vadd.f32 %v323, %v312
        %v325 = vrot.slane %v324, 4
        %v326 = vadd.f32 %v324, %v325
        %v327 = vrot.slane %v326, 2
        %v328 = vadd.f32 %v326, %v327
        %v329 = vrot.slane %v328, 1
        %v330 = vadd.f32 %v328, %v329
        %v331 = vmax.f32 %v321, 1e-24
        %v332 = vmax.f32 %v330, 1e-24
        %v333 = vrsqrt.pop %v331
        %v334 = vrsqrt.pop %v332
        %v335 = vmul.f32 %v295, %v333
        %v336 = vmul.f32 %v297, %v334
        %v337 = vmul.f32 %v301, %v333
        %v338 = vmul.f32 %v303, %v334
        %340 = vset.pattern.permute.xlu0 0
        %341 = vperm.xlu0 %340, %v211
        %v342 = vpop.permute.xlu0 %341
        %345 = vset.pattern.permute.xlu0 0
        %346 = vperm.xlu0 %345, %v212
        %v347 = vpop.permute.xlu0 %346
        %v349 = vadd.f32 %v335, %v342
        %v350 = vadd.f32 %v336, %v342
        %v351 = vadd.f32 %v337, %v347
        %v352 = vadd.f32 %v338, %v347
        %353 = vst [vmem:[%s206] sm:$0xff] %v349
        %354 = vst [vmem:[%s206 + $0x8] sm:$0xff] %v350
        %355 = vst [vmem:[%s206 + $0x10] sm:$0xff] %v351
        %356 = vst [vmem:[%s206 + $0x18] sm:$0xff] %v352
        %s357 = sand.u32 %s112, 1
        %s358 = scalar_lea.sflag [#allocation4], %s357
        %s359 = sand.u32 %s112, 1
        %s360 = smul.addr %s359, 32
        %s361 = scalar_lea.vmem [#allocation5], %s360
        // Predicated region
        $region37: #{tpu_custom_call.1} parent=31 // pred_check
          %p362 = pneg %p122
        $region38: #{tpu_custom_call.1} parent=31 // pred_check_branch
          %364 = sbr.rel (%p362) target = $region40
        $region39: #{tpu_custom_call.1} parent=31 // pred_region
          %s365 = smul.u32 2, %s25
          %s367 = ssub.s32 512, 512
          %368 = vsyncadd %s358, %s367
          %s369 = smul.addr %s24, 4
          %s370 = sadd.s32 %s365, %s369
          %s371 = smul.addr %s370, 128
          %s372 = scalar_lea.hbm %s3, %s371
          %s373 = sshll.u32 %s361, 4
          %s374 = int_to_ptr.vmem [resolvable:$true] %s373
          %379 = dma.vmem_to_hbm [thread:$0]  %s374, 512, %s372, %s358, 256, 256, 16
        $region40: #{tpu_custom_call.1} parent=31 // pred_fallthru
          _
      $region32: #{tpu_custom_call.1} parent=5 // pred_fallthru
        _
      %p380 = scmp.le.s32.totalorder 2, %s15
      // Predicated region
      $region41: #{tpu_custom_call.1} parent=5 // pred_check
        %p381 = pneg %p380
      $region42: #{tpu_custom_call.1} parent=5 // pred_check_branch
        %383 = sbr.rel (%p381) target = $region44
      $region43: #{tpu_custom_call.1} parent=5 // pred_region
        %s384 = ssub.s32 %s15, 2
        // Predicated region
        $region45: #{tpu_custom_call.1} parent=43 // pred_check
          %p385 = pneg %p128
        $region46: #{tpu_custom_call.1} parent=43 // pred_check_branch
          %387 = sbr.rel (%p385) target = $region48
        $region47: #{tpu_custom_call.1} parent=43 // pred_region
          %s388 = sand.u32 %s113, 1
          %s389 = scalar_lea.sflag [#allocation4], %s388
          %s390 = sand.u32 %s113, 1
          %s391 = smul.addr %s390, 32
          %s392 = scalar_lea.vmem [#allocation5], %s391
          %393 = dma.done %s389, 512
        $region48: #{tpu_custom_call.1} parent=43 // pred_fallthru
          _
      $region44: #{tpu_custom_call.1} parent=5 // pred_fallthru
        _
    $region6: #{tpu_custom_call.1} parent=1 // loop_footer
      %s19 = sadd.s32 1, %s15
    $region7: #{tpu_custom_call.1} parent=1 // loop_footer_branch
      %14 = sbr.rel target = $region3
    $region8: #{tpu_custom_call.1} parent=1 // loop_exit
      _
    %394 = vsyncpa [#allocation3], 1
    %s395 = scalar_lea.sflag [#allocation3], 1
    %396 = vsyncpa %s395, 1
    %397 = vsyncpa [#allocation4], 1
    %s398 = scalar_lea.sflag [#allocation4], 1
    %399 = vsyncpa %s398, 1

</llo_original>
